<compile_context>
chip_gen: v5e
topology: v5e:2x2
jax: 0.10.0
libtpu: 0.0.40
codegen_flags: <defaults>
</compile_context>

<pallas_src>
import jax
import jax.numpy as jnp
from jax.experimental import pallas as pl
from jax.experimental.pallas import tpu as pltpu


def mlp_kernel(x_ref, w1_ref, b1_ref, w2_ref, b2_ref, o_ref):
    # x_ref : VMEM (F_in, TB)  -- features on sublanes, batch on lanes
    # w1_ref: SMEM (F_in*F_hid,) flattened row-major [k, j] -> k*F_hid + j
    # b1_ref: SMEM (F_hid,)
    # w2_ref: SMEM (F_hid,)
    # b2_ref: SMEM (1,)
    # o_ref : VMEM (1, TB)
    f_in, tb = x_ref.shape
    f_hid = b1_ref.shape[0]

    x = x_ref[...]  # (F_in, TB) f32, one DMA'd tile

    # Second-layer bias broadcast across the batch lanes.
    y = jnp.full((1, tb), b2_ref[0], dtype=jnp.float32)

    # Fully unrolled two-layer MLP as scalar-broadcast FMAs on the VPU.
    for j in range(f_hid):
        h = jnp.full((1, tb), b1_ref[j], dtype=jnp.float32)
        for k in range(f_in):
            h = h + w1_ref[k * f_hid + j] * x[k:k + 1, :]
        h = jnp.maximum(h, 0.0)          # ReLU
        y = y + w2_ref[j] * h

    o_ref[...] = y.astype(o_ref.dtype)


def simple_model_forward(x, w1, b1, w2, b2):
    """x: [B, 10] f32. w1: [10, 5], b1: [5], w2: [5, 1], b2: [1]. Returns [B, 1]."""
    B, f_in = x.shape
    f_hid = w1.shape[1]
    f_out = w2.shape[1]

    # Batch tile on the lane axis: multiple of 128; 512 for good DMA pipelining
    # on large batches (x tile = 10*512*4 B = 20 KiB -> trivially fits VMEM on
    # every generation, including v7x's 64 MiB, even with double buffering).
    lane = 128
    tb = 512 if B >= 512 else lane
    nb = -(-B // tb)                     # ceil-div
    b_pad = nb * tb

    # Batch-on-lanes layout (features -> sublanes, batch -> lanes), zero-padded
    # to a whole number of tiles.  Padding columns are sliced off afterwards.
    xt = x.T                             # (F_in, B)
    if b_pad != B:
        xt = jnp.pad(xt, ((0, 0), (0, b_pad - B)))

    # Flatten the 61 parameter scalars for SMEM residency (copied once).
    w1_flat = w1.reshape(-1).astype(jnp.float32)   # (F_in * F_hid,)
    b1_flat = b1.reshape(-1).astype(jnp.float32)   # (F_hid,)
    w2_flat = w2.reshape(-1).astype(jnp.float32)   # (F_hid,)
    b2_flat = b2.reshape(-1).astype(jnp.float32)   # (1,)

    flops = 2 * b_pad * (f_in * f_hid + f_hid * f_out) + b_pad * f_hid
    bytes_accessed = 4 * (b_pad * (f_in + f_out)
                          + w1_flat.size + b1_flat.size + w2_flat.size + b2_flat.size)

    out_t = pl.pallas_call(
        mlp_kernel,
        out_shape=jax.ShapeDtypeStruct((f_out, b_pad), jnp.float32),
        grid_spec=pltpu.PrefetchScalarGridSpec(
            num_scalar_prefetch=0,
            grid=(nb,),
            in_specs=[
                # Streamed, double-buffered x^T tile (lane-dense).
                pl.BlockSpec((f_in, tb), lambda i: (0, i)),
                # Parameters: whole arrays, resident in SMEM for the entire grid.
                pl.BlockSpec(memory_space=pltpu.MemorySpace.SMEM),
                pl.BlockSpec(memory_space=pltpu.MemorySpace.SMEM),
                pl.BlockSpec(memory_space=pltpu.MemorySpace.SMEM),
                pl.BlockSpec(memory_space=pltpu.MemorySpace.SMEM),
            ],
            out_specs=pl.BlockSpec((f_out, tb), lambda i: (0, i)),
        ),
        compiler_params=pltpu.CompilerParams(
            # Independent batch tiles -> shardable across v7x's two TensorCores.
            dimension_semantics=("parallel",)),
        cost_estimate=pl.CostEstimate(
            flops=flops, transcendentals=0, bytes_accessed=bytes_accessed),
    )(xt, w1_flat, b1_flat, w2_flat, b2_flat)

    # Back to the PyTorch layout [B, 1].
    return out_t[:, :B].T
    # TODO(synk): for very large batches on v6e/v7x, x/out could be streamed as
    # bf16 (f32 compute inside) to halve HBM traffic; kept f32 for v5e safety.


def init_params(key):
    """Deterministic init mimicking nn.Linear's U(-1/sqrt(fan_in), 1/sqrt(fan_in))."""
    k1, k2, k3, k4 = jax.random.split(key, 4)
    bound1 = 1.0 / jnp.sqrt(10.0)
    bound2 = 1.0 / jnp.sqrt(5.0)
    # Stored as [in, out] (transposed relative to PyTorch's [out, in]).
    w1 = jax.random.uniform(k1, (10, 5), jnp.float32, -bound1, bound1)
    b1 = jax.random.uniform(k2, (5,), jnp.float32, -bound1, bound1)
    w2 = jax.random.uniform(k3, (5, 1), jnp.float32, -bound2, bound2)
    b2 = jax.random.uniform(k4, (1,), jnp.float32, -bound2, bound2)
    return w1, b1, w2, b2


if __name__ == "__main__":
    key = jax.random.PRNGKey(0)
    k_x, k_p = jax.random.split(key)

    # Small batch; deliberately not a multiple of 128 to exercise the padding
    # path and a multi-step (grid=2) pipelined batch axis.
    B = 200
    x = jax.random.normal(k_x, (B, 10), jnp.float32)
    w1, b1, w2, b2 = init_params(k_p)

    out = simple_model_forward(x, w1, b1, w2, b2)
    out = jax.block_until_ready(out)

    # Reference check in plain JAX.
    ref = jnp.maximum(x @ w1 + b1, 0.0) @ w2 + b2
    assert out.shape == (B, 1)
    assert jnp.allclose(out, ref, atol=1e-5, rtol=1e-5)

    print("KERNEL_OK")
</pallas_src>

<mosaic_0001>
module attributes {stable_mosaic.version = 11 : i64} {
  func.func @mlp_kernel(%arg0: i32, %arg1: memref<10x128xf32, #tpu.memory_space<vmem>>, %arg2: memref<50xf32, #tpu.memory_space<smem>>, %arg3: memref<5xf32, #tpu.memory_space<smem>>, %arg4: memref<5xf32, #tpu.memory_space<smem>>, %arg5: memref<1xf32, #tpu.memory_space<smem>>, %arg6: memref<1x128xf32, #tpu.memory_space<vmem>>) attributes {dimension_semantics = [#tpu.dimension_semantics<parallel>], iteration_bounds = array<i64: 2>, scalar_prefetch = 0 : i64, scratch_operands = 0 : i64, tpu.core_type = #tpu.core_type<tc>, window_params = [{transform_indices = @transform_0, window_bounds = array<i64: 10, 128>}, {transform_indices = @transform_1, window_bounds = array<i64: 50>}, {transform_indices = @transform_2, window_bounds = array<i64: 5>}, {transform_indices = @transform_3, window_bounds = array<i64: 5>}, {transform_indices = @transform_4, window_bounds = array<i64: 1>}, {transform_indices = @transform_5, window_bounds = array<i64: 1, 128>}]} {
    %c0 = arith.constant 0 : index
    %c0_0 = arith.constant 0 : index
    %0 = vector.load %arg1[%c0, %c0_0] : memref<10x128xf32, #tpu.memory_space<vmem>>, vector<10x128xf32>
    %c0_1 = arith.constant 0 : index
    %1 = memref.load %arg5[%c0_1] : memref<1xf32, #tpu.memory_space<smem>>
    %2 = vector.broadcast %1 : f32 to vector<1x128xf32>
    %c0_2 = arith.constant 0 : index
    %3 = memref.load %arg3[%c0_2] : memref<5xf32, #tpu.memory_space<smem>>
    %4 = vector.broadcast %3 : f32 to vector<1x128xf32>
    %c0_3 = arith.constant 0 : index
    %5 = memref.load %arg2[%c0_3] : memref<50xf32, #tpu.memory_space<smem>>
    %6 = vector.extract_strided_slice %0 {offsets = [0, 0], sizes = [1, 128], strides = [1, 1]} : vector<10x128xf32> to vector<1x128xf32>
    %7 = vector.broadcast %5 : f32 to vector<1x128xf32>
    %8 = arith.mulf %7, %6 : vector<1x128xf32>
    %9 = arith.addf %4, %8 : vector<1x128xf32>
    %c5 = arith.constant 5 : index
    %10 = memref.load %arg2[%c5] : memref<50xf32, #tpu.memory_space<smem>>
    %11 = vector.extract_strided_slice %0 {offsets = [1, 0], sizes = [1, 128], strides = [1, 1]} : vector<10x128xf32> to vector<1x128xf32>
    %12 = vector.broadcast %10 : f32 to vector<1x128xf32>
    %13 = arith.mulf %12, %11 : vector<1x128xf32>
    %14 = arith.addf %9, %13 : vector<1x128xf32>
    %c10 = arith.constant 10 : index
    %15 = memref.load %arg2[%c10] : memref<50xf32, #tpu.memory_space<smem>>
    %16 = vector.extract_strided_slice %0 {offsets = [2, 0], sizes = [1, 128], strides = [1, 1]} : vector<10x128xf32> to vector<1x128xf32>
    %17 = vector.broadcast %15 : f32 to vector<1x128xf32>
    %18 = arith.mulf %17, %16 : vector<1x128xf32>
    %19 = arith.addf %14, %18 : vector<1x128xf32>
    %c15 = arith.constant 15 : index
    %20 = memref.load %arg2[%c15] : memref<50xf32, #tpu.memory_space<smem>>
    %21 = vector.extract_strided_slice %0 {offsets = [3, 0], sizes = [1, 128], strides = [1, 1]} : vector<10x128xf32> to vector<1x128xf32>
    %22 = vector.broadcast %20 : f32 to vector<1x128xf32>
    %23 = arith.mulf %22, %21 : vector<1x128xf32>
    %24 = arith.addf %19, %23 : vector<1x128xf32>
    %c20 = arith.constant 20 : index
    %25 = memref.load %arg2[%c20] : memref<50xf32, #tpu.memory_space<smem>>
    %26 = vector.extract_strided_slice %0 {offsets = [4, 0], sizes = [1, 128], strides = [1, 1]} : vector<10x128xf32> to vector<1x128xf32>
    %27 = vector.broadcast %25 : f32 to vector<1x128xf32>
    %28 = arith.mulf %27, %26 : vector<1x128xf32>
    %29 = arith.addf %24, %28 : vector<1x128xf32>
    %c25 = arith.constant 25 : index
    %30 = memref.load %arg2[%c25] : memref<50xf32, #tpu.memory_space<smem>>
    %31 = vector.extract_strided_slice %0 {offsets = [5, 0], sizes = [1, 128], strides = [1, 1]} : vector<10x128xf32> to vector<1x128xf32>
    %32 = vector.broadcast %30 : f32 to vector<1x128xf32>
    %33 = arith.mulf %32, %31 : vector<1x128xf32>
    %34 = arith.addf %29, %33 : vector<1x128xf32>
    %c30 = arith.constant 30 : index
    %35 = memref.load %arg2[%c30] : memref<50xf32, #tpu.memory_space<smem>>
    %36 = vector.extract_strided_slice %0 {offsets = [6, 0], sizes = [1, 128], strides = [1, 1]} : vector<10x128xf32> to vector<1x128xf32>
    %37 = vector.broadcast %35 : f32 to vector<1x128xf32>
    %38 = arith.mulf %37, %36 : vector<1x128xf32>
    %39 = arith.addf %34, %38 : vector<1x128xf32>
    %c35 = arith.constant 35 : index
    %40 = memref.load %arg2[%c35] : memref<50xf32, #tpu.memory_space<smem>>
    %41 = vector.extract_strided_slice %0 {offsets = [7, 0], sizes = [1, 128], strides = [1, 1]} : vector<10x128xf32> to vector<1x128xf32>
    %42 = vector.broadcast %40 : f32 to vector<1x128xf32>
    %43 = arith.mulf %42, %41 : vector<1x128xf32>
    %44 = arith.addf %39, %43 : vector<1x128xf32>
    %c40 = arith.constant 40 : index
    %45 = memref.load %arg2[%c40] : memref<50xf32, #tpu.memory_space<smem>>
    %46 = vector.extract_strided_slice %0 {offsets = [8, 0], sizes = [1, 128], strides = [1, 1]} : vector<10x128xf32> to vector<1x128xf32>
    %47 = vector.broadcast %45 : f32 to vector<1x128xf32>
    %48 = arith.mulf %47, %46 : vector<1x128xf32>
    %49 = arith.addf %44, %48 : vector<1x128xf32>
    %c45 = arith.constant 45 : index
    %50 = memref.load %arg2[%c45] : memref<50xf32, #tpu.memory_space<smem>>
    %51 = vector.extract_strided_slice %0 {offsets = [9, 0], sizes = [1, 128], strides = [1, 1]} : vector<10x128xf32> to vector<1x128xf32>
    %52 = vector.broadcast %50 : f32 to vector<1x128xf32>
    %53 = arith.mulf %52, %51 : vector<1x128xf32>
    %54 = arith.addf %49, %53 : vector<1x128xf32>
    %cst = arith.constant 0.000000e+00 : f32
    %55 = vector.broadcast %cst : f32 to vector<1x128xf32>
    %56 = arith.maximumf %54, %55 : vector<1x128xf32>
    %c0_4 = arith.constant 0 : index
    %57 = memref.load %arg4[%c0_4] : memref<5xf32, #tpu.memory_space<smem>>
    %58 = vector.broadcast %57 : f32 to vector<1x128xf32>
    %59 = arith.mulf %58, %56 : vector<1x128xf32>
    %60 = arith.addf %2, %59 : vector<1x128xf32>
    %c1 = arith.constant 1 : index
    %61 = memref.load %arg3[%c1] : memref<5xf32, #tpu.memory_space<smem>>
    %62 = vector.broadcast %61 : f32 to vector<1x128xf32>
    %c1_5 = arith.constant 1 : index
    %63 = memref.load %arg2[%c1_5] : memref<50xf32, #tpu.memory_space<smem>>
    %64 = vector.extract_strided_slice %0 {offsets = [0, 0], sizes = [1, 128], strides = [1, 1]} : vector<10x128xf32> to vector<1x128xf32>
    %65 = vector.broadcast %63 : f32 to vector<1x128xf32>
    %66 = arith.mulf %65, %64 : vector<1x128xf32>
    %67 = arith.addf %62, %66 : vector<1x128xf32>
    %c6 = arith.constant 6 : index
    %68 = memref.load %arg2[%c6] : memref<50xf32, #tpu.memory_space<smem>>
    %69 = vector.extract_strided_slice %0 {offsets = [1, 0], sizes = [1, 128], strides = [1, 1]} : vector<10x128xf32> to vector<1x128xf32>
    %70 = vector.broadcast %68 : f32 to vector<1x128xf32>
    %71 = arith.mulf %70, %69 : vector<1x128xf32>
    %72 = arith.addf %67, %71 : vector<1x128xf32>
    %c11 = arith.constant 11 : index
    %73 = memref.load %arg2[%c11] : memref<50xf32, #tpu.memory_space<smem>>
    %74 = vector.extract_strided_slice %0 {offsets = [2, 0], sizes = [1, 128], strides = [1, 1]} : vector<10x128xf32> to vector<1x128xf32>
    %75 = vector.broadcast %73 : f32 to vector<1x128xf32>
    %76 = arith.mulf %75, %74 : vector<1x128xf32>
    %77 = arith.addf %72, %76 : vector<1x128xf32>
    %c16 = arith.constant 16 : index
    %78 = memref.load %arg2[%c16] : memref<50xf32, #tpu.memory_space<smem>>
    %79 = vector.extract_strided_slice %0 {offsets = [3, 0], sizes = [1, 128], strides = [1, 1]} : vector<10x128xf32> to vector<1x128xf32>
    %80 = vector.broadcast %78 : f32 to vector<1x128xf32>
    %81 = arith.mulf %80, %79 : vector<1x128xf32>
    %82 = arith.addf %77, %81 : vector<1x128xf32>
    %c21 = arith.constant 21 : index
    %83 = memref.load %arg2[%c21] : memref<50xf32, #tpu.memory_space<smem>>
    %84 = vector.extract_strided_slice %0 {offsets = [4, 0], sizes = [1, 128], strides = [1, 1]} : vector<10x128xf32> to vector<1x128xf32>
    %85 = vector.broadcast %83 : f32 to vector<1x128xf32>
    %86 = arith.mulf %85, %84 : vector<1x128xf32>
    %87 = arith.addf %82, %86 : vector<1x128xf32>
    %c26 = arith.constant 26 : index
    %88 = memref.load %arg2[%c26] : memref<50xf32, #tpu.memory_space<smem>>
    %89 = vector.extract_strided_slice %0 {offsets = [5, 0], sizes = [1, 128], strides = [1, 1]} : vector<10x128xf32> to vector<1x128xf32>
    %90 = vector.broadcast %88 : f32 to vector<1x128xf32>
    %91 = arith.mulf %90, %89 : vector<1x128xf32>
    %92 = arith.addf %87, %91 : vector<1x128xf32>
    %c31 = arith.constant 31 : index
    %93 = memref.load %arg2[%c31] : memref<50xf32, #tpu.memory_space<smem>>
    %94 = vector.extract_strided_slice %0 {offsets = [6, 0], sizes = [1, 128], strides = [1, 1]} : vector<10x128xf32> to vector<1x128xf32>
    %95 = vector.broadcast %93 : f32 to vector<1x128xf32>
    %96 = arith.mulf %95, %94 : vector<1x128xf32>
    %97 = arith.addf %92, %96 : vector<1x128xf32>
    %c36 = arith.constant 36 : index
    %98 = memref.load %arg2[%c36] : memref<50xf32, #tpu.memory_space<smem>>
    %99 = vector.extract_strided_slice %0 {offsets = [7, 0], sizes = [1, 128], strides = [1, 1]} : vector<10x128xf32> to vector<1x128xf32>
    %100 = vector.broadcast %98 : f32 to vector<1x128xf32>
    %101 = arith.mulf %100, %99 : vector<1x128xf32>
    %102 = arith.addf %97, %101 : vector<1x128xf32>
    %c41 = arith.constant 41 : index
    %103 = memref.load %arg2[%c41] : memref<50xf32, #tpu.memory_space<smem>>
    %104 = vector.extract_strided_slice %0 {offsets = [8, 0], sizes = [1, 128], strides = [1, 1]} : vector<10x128xf32> to vector<1x128xf32>
    %105 = vector.broadcast %103 : f32 to vector<1x128xf32>
    %106 = arith.mulf %105, %104 : vector<1x128xf32>
    %107 = arith.addf %102, %106 : vector<1x128xf32>
    %c46 = arith.constant 46 : index
    %108 = memref.load %arg2[%c46] : memref<50xf32, #tpu.memory_space<smem>>
    %109 = vector.extract_strided_slice %0 {offsets = [9, 0], sizes = [1, 128], strides = [1, 1]} : vector<10x128xf32> to vector<1x128xf32>
    %110 = vector.broadcast %108 : f32 to vector<1x128xf32>
    %111 = arith.mulf %110, %109 : vector<1x128xf32>
    %112 = arith.addf %107, %111 : vector<1x128xf32>
    %cst_6 = arith.constant 0.000000e+00 : f32
    %113 = vector.broadcast %cst_6 : f32 to vector<1x128xf32>
    %114 = arith.maximumf %112, %113 : vector<1x128xf32>
    %c1_7 = arith.constant 1 : index
    %115 = memref.load %arg4[%c1_7] : memref<5xf32, #tpu.memory_space<smem>>
    %116 = vector.broadcast %115 : f32 to vector<1x128xf32>
    %117 = arith.mulf %116, %114 : vector<1x128xf32>
    %118 = arith.addf %60, %117 : vector<1x128xf32>
    %c2 = arith.constant 2 : index
    %119 = memref.load %arg3[%c2] : memref<5xf32, #tpu.memory_space<smem>>
    %120 = vector.broadcast %119 : f32 to vector<1x128xf32>
    %c2_8 = arith.constant 2 : index
    %121 = memref.load %arg2[%c2_8] : memref<50xf32, #tpu.memory_space<smem>>
    %122 = vector.extract_strided_slice %0 {offsets = [0, 0], sizes = [1, 128], strides = [1, 1]} : vector<10x128xf32> to vector<1x128xf32>
    %123 = vector.broadcast %121 : f32 to vector<1x128xf32>
    %124 = arith.mulf %123, %122 : vector<1x128xf32>
    %125 = arith.addf %120, %124 : vector<1x128xf32>
    %c7 = arith.constant 7 : index
    %126 = memref.load %arg2[%c7] : memref<50xf32, #tpu.memory_space<smem>>
    %127 = vector.extract_strided_slice %0 {offsets = [1, 0], sizes = [1, 128], strides = [1, 1]} : vector<10x128xf32> to vector<1x128xf32>
    %128 = vector.broadcast %126 : f32 to vector<1x128xf32>
    %129 = arith.mulf %128, %127 : vector<1x128xf32>
    %130 = arith.addf %125, %129 : vector<1x128xf32>
    %c12 = arith.constant 12 : index
    %131 = memref.load %arg2[%c12] : memref<50xf32, #tpu.memory_space<smem>>
    %132 = vector.extract_strided_slice %0 {offsets = [2, 0], sizes = [1, 128], strides = [1, 1]} : vector<10x128xf32> to vector<1x128xf32>
    %133 = vector.broadcast %131 : f32 to vector<1x128xf32>
    %134 = arith.mulf %133, %132 : vector<1x128xf32>
    %135 = arith.addf %130, %134 : vector<1x128xf32>
    %c17 = arith.constant 17 : index
    %136 = memref.load %arg2[%c17] : memref<50xf32, #tpu.memory_space<smem>>
    %137 = vector.extract_strided_slice %0 {offsets = [3, 0], sizes = [1, 128], strides = [1, 1]} : vector<10x128xf32> to vector<1x128xf32>
    %138 = vector.broadcast %136 : f32 to vector<1x128xf32>
    %139 = arith.mulf %138, %137 : vector<1x128xf32>
    %140 = arith.addf %135, %139 : vector<1x128xf32>
    %c22 = arith.constant 22 : index
    %141 = memref.load %arg2[%c22] : memref<50xf32, #tpu.memory_space<smem>>
    %142 = vector.extract_strided_slice %0 {offsets = [4, 0], sizes = [1, 128], strides = [1, 1]} : vector<10x128xf32> to vector<1x128xf32>
    %143 = vector.broadcast %141 : f32 to vector<1x128xf32>
    %144 = arith.mulf %143, %142 : vector<1x128xf32>
    %145 = arith.addf %140, %144 : vector<1x128xf32>
    %c27 = arith.constant 27 : index
    %146 = memref.load %arg2[%c27] : memref<50xf32, #tpu.memory_space<smem>>
    %147 = vector.extract_strided_slice %0 {offsets = [5, 0], sizes = [1, 128], strides = [1, 1]} : vector<10x128xf32> to vector<1x128xf32>
    %148 = vector.broadcast %146 : f32 to vector<1x128xf32>
    %149 = arith.mulf %148, %147 : vector<1x128xf32>
    %150 = arith.addf %145, %149 : vector<1x128xf32>
    %c32 = arith.constant 32 : index
    %151 = memref.load %arg2[%c32] : memref<50xf32, #tpu.memory_space<smem>>
    %152 = vector.extract_strided_slice %0 {offsets = [6, 0], sizes = [1, 128], strides = [1, 1]} : vector<10x128xf32> to vector<1x128xf32>
    %153 = vector.broadcast %151 : f32 to vector<1x128xf32>
    %154 = arith.mulf %153, %152 : vector<1x128xf32>
    %155 = arith.addf %150, %154 : vector<1x128xf32>
    %c37 = arith.constant 37 : index
    %156 = memref.load %arg2[%c37] : memref<50xf32, #tpu.memory_space<smem>>
    %157 = vector.extract_strided_slice %0 {offsets = [7, 0], sizes = [1, 128], strides = [1, 1]} : vector<10x128xf32> to vector<1x128xf32>
    %158 = vector.broadcast %156 : f32 to vector<1x128xf32>
    %159 = arith.mulf %158, %157 : vector<1x128xf32>
    %160 = arith.addf %155, %159 : vector<1x128xf32>
    %c42 = arith.constant 42 : index
    %161 = memref.load %arg2[%c42] : memref<50xf32, #tpu.memory_space<smem>>
    %162 = vector.extract_strided_slice %0 {offsets = [8, 0], sizes = [1, 128], strides = [1, 1]} : vector<10x128xf32> to vector<1x128xf32>
    %163 = vector.broadcast %161 : f32 to vector<1x128xf32>
    %164 = arith.mulf %163, %162 : vector<1x128xf32>
    %165 = arith.addf %160, %164 : vector<1x128xf32>
    %c47 = arith.constant 47 : index
    %166 = memref.load %arg2[%c47] : memref<50xf32, #tpu.memory_space<smem>>
    %167 = vector.extract_strided_slice %0 {offsets = [9, 0], sizes = [1, 128], strides = [1, 1]} : vector<10x128xf32> to vector<1x128xf32>
    %168 = vector.broadcast %166 : f32 to vector<1x128xf32>
    %169 = arith.mulf %168, %167 : vector<1x128xf32>
    %170 = arith.addf %165, %169 : vector<1x128xf32>
    %cst_9 = arith.constant 0.000000e+00 : f32
    %171 = vector.broadcast %cst_9 : f32 to vector<1x128xf32>
    %172 = arith.maximumf %170, %171 : vector<1x128xf32>
    %c2_10 = arith.constant 2 : index
    %173 = memref.load %arg4[%c2_10] : memref<5xf32, #tpu.memory_space<smem>>
    %174 = vector.broadcast %173 : f32 to vector<1x128xf32>
    %175 = arith.mulf %174, %172 : vector<1x128xf32>
    %176 = arith.addf %118, %175 : vector<1x128xf32>
    %c3 = arith.constant 3 : index
    %177 = memref.load %arg3[%c3] : memref<5xf32, #tpu.memory_space<smem>>
    %178 = vector.broadcast %177 : f32 to vector<1x128xf32>
    %c3_11 = arith.constant 3 : index
    %179 = memref.load %arg2[%c3_11] : memref<50xf32, #tpu.memory_space<smem>>
    %180 = vector.extract_strided_slice %0 {offsets = [0, 0], sizes = [1, 128], strides = [1, 1]} : vector<10x128xf32> to vector<1x128xf32>
    %181 = vector.broadcast %179 : f32 to vector<1x128xf32>
    %182 = arith.mulf %181, %180 : vector<1x128xf32>
    %183 = arith.addf %178, %182 : vector<1x128xf32>
    %c8 = arith.constant 8 : index
    %184 = memref.load %arg2[%c8] : memref<50xf32, #tpu.memory_space<smem>>
    %185 = vector.extract_strided_slice %0 {offsets = [1, 0], sizes = [1, 128], strides = [1, 1]} : vector<10x128xf32> to vector<1x128xf32>
    %186 = vector.broadcast %184 : f32 to vector<1x128xf32>
    %187 = arith.mulf %186, %185 : vector<1x128xf32>
    %188 = arith.addf %183, %187 : vector<1x128xf32>
    %c13 = arith.constant 13 : index
    %189 = memref.load %arg2[%c13] : memref<50xf32, #tpu.memory_space<smem>>
    %190 = vector.extract_strided_slice %0 {offsets = [2, 0], sizes = [1, 128], strides = [1, 1]} : vector<10x128xf32> to vector<1x128xf32>
    %191 = vector.broadcast %189 : f32 to vector<1x128xf32>
    %192 = arith.mulf %191, %190 : vector<1x128xf32>
    %193 = arith.addf %188, %192 : vector<1x128xf32>
    %c18 = arith.constant 18 : index
    %194 = memref.load %arg2[%c18] : memref<50xf32, #tpu.memory_space<smem>>
    %195 = vector.extract_strided_slice %0 {offsets = [3, 0], sizes = [1, 128], strides = [1, 1]} : vector<10x128xf32> to vector<1x128xf32>
    %196 = vector.broadcast %194 : f32 to vector<1x128xf32>
    %197 = arith.mulf %196, %195 : vector<1x128xf32>
    %198 = arith.addf %193, %197 : vector<1x128xf32>
    %c23 = arith.constant 23 : index
    %199 = memref.load %arg2[%c23] : memref<50xf32, #tpu.memory_space<smem>>
    %200 = vector.extract_strided_slice %0 {offsets = [4, 0], sizes = [1, 128], strides = [1, 1]} : vector<10x128xf32> to vector<1x128xf32>
    %201 = vector.broadcast %199 : f32 to vector<1x128xf32>
    %202 = arith.mulf %201, %200 : vector<1x128xf32>
    %203 = arith.addf %198, %202 : vector<1x128xf32>
    %c28 = arith.constant 28 : index
    %204 = memref.load %arg2[%c28] : memref<50xf32, #tpu.memory_space<smem>>
    %205 = vector.extract_strided_slice %0 {offsets = [5, 0], sizes = [1, 128], strides = [1, 1]} : vector<10x128xf32> to vector<1x128xf32>
    %206 = vector.broadcast %204 : f32 to vector<1x128xf32>
    %207 = arith.mulf %206, %205 : vector<1x128xf32>
    %208 = arith.addf %203, %207 : vector<1x128xf32>
    %c33 = arith.constant 33 : index
    %209 = memref.load %arg2[%c33] : memref<50xf32, #tpu.memory_space<smem>>
    %210 = vector.extract_strided_slice %0 {offsets = [6, 0], sizes = [1, 128], strides = [1, 1]} : vector<10x128xf32> to vector<1x128xf32>
    %211 = vector.broadcast %209 : f32 to vector<1x128xf32>
    %212 = arith.mulf %211, %210 : vector<1x128xf32>
    %213 = arith.addf %208, %212 : vector<1x128xf32>
    %c38 = arith.constant 38 : index
    %214 = memref.load %arg2[%c38] : memref<50xf32, #tpu.memory_space<smem>>
    %215 = vector.extract_strided_slice %0 {offsets = [7, 0], sizes = [1, 128], strides = [1, 1]} : vector<10x128xf32> to vector<1x128xf32>
    %216 = vector.broadcast %214 : f32 to vector<1x128xf32>
    %217 = arith.mulf %216, %215 : vector<1x128xf32>
    %218 = arith.addf %213, %217 : vector<1x128xf32>
    %c43 = arith.constant 43 : index
    %219 = memref.load %arg2[%c43] : memref<50xf32, #tpu.memory_space<smem>>
    %220 = vector.extract_strided_slice %0 {offsets = [8, 0], sizes = [1, 128], strides = [1, 1]} : vector<10x128xf32> to vector<1x128xf32>
    %221 = vector.broadcast %219 : f32 to vector<1x128xf32>
    %222 = arith.mulf %221, %220 : vector<1x128xf32>
    %223 = arith.addf %218, %222 : vector<1x128xf32>
    %c48 = arith.constant 48 : index
    %224 = memref.load %arg2[%c48] : memref<50xf32, #tpu.memory_space<smem>>
    %225 = vector.extract_strided_slice %0 {offsets = [9, 0], sizes = [1, 128], strides = [1, 1]} : vector<10x128xf32> to vector<1x128xf32>
    %226 = vector.broadcast %224 : f32 to vector<1x128xf32>
    %227 = arith.mulf %226, %225 : vector<1x128xf32>
    %228 = arith.addf %223, %227 : vector<1x128xf32>
    %cst_12 = arith.constant 0.000000e+00 : f32
    %229 = vector.broadcast %cst_12 : f32 to vector<1x128xf32>
    %230 = arith.maximumf %228, %229 : vector<1x128xf32>
    %c3_13 = arith.constant 3 : index
    %231 = memref.load %arg4[%c3_13] : memref<5xf32, #tpu.memory_space<smem>>
    %232 = vector.broadcast %231 : f32 to vector<1x128xf32>
    %233 = arith.mulf %232, %230 : vector<1x128xf32>
    %234 = arith.addf %176, %233 : vector<1x128xf32>
    %c4 = arith.constant 4 : index
    %235 = memref.load %arg3[%c4] : memref<5xf32, #tpu.memory_space<smem>>
    %236 = vector.broadcast %235 : f32 to vector<1x128xf32>
    %c4_14 = arith.constant 4 : index
    %237 = memref.load %arg2[%c4_14] : memref<50xf32, #tpu.memory_space<smem>>
    %238 = vector.extract_strided_slice %0 {offsets = [0, 0], sizes = [1, 128], strides = [1, 1]} : vector<10x128xf32> to vector<1x128xf32>
    %239 = vector.broadcast %237 : f32 to vector<1x128xf32>
    %240 = arith.mulf %239, %238 : vector<1x128xf32>
    %241 = arith.addf %236, %240 : vector<1x128xf32>
    %c9 = arith.constant 9 : index
    %242 = memref.load %arg2[%c9] : memref<50xf32, #tpu.memory_space<smem>>
    %243 = vector.extract_strided_slice %0 {offsets = [1, 0], sizes = [1, 128], strides = [1, 1]} : vector<10x128xf32> to vector<1x128xf32>
    %244 = vector.broadcast %242 : f32 to vector<1x128xf32>
    %245 = arith.mulf %244, %243 : vector<1x128xf32>
    %246 = arith.addf %241, %245 : vector<1x128xf32>
    %c14 = arith.constant 14 : index
    %247 = memref.load %arg2[%c14] : memref<50xf32, #tpu.memory_space<smem>>
    %248 = vector.extract_strided_slice %0 {offsets = [2, 0], sizes = [1, 128], strides = [1, 1]} : vector<10x128xf32> to vector<1x128xf32>
    %249 = vector.broadcast %247 : f32 to vector<1x128xf32>
    %250 = arith.mulf %249, %248 : vector<1x128xf32>
    %251 = arith.addf %246, %250 : vector<1x128xf32>
    %c19 = arith.constant 19 : index
    %252 = memref.load %arg2[%c19] : memref<50xf32, #tpu.memory_space<smem>>
    %253 = vector.extract_strided_slice %0 {offsets = [3, 0], sizes = [1, 128], strides = [1, 1]} : vector<10x128xf32> to vector<1x128xf32>
    %254 = vector.broadcast %252 : f32 to vector<1x128xf32>
    %255 = arith.mulf %254, %253 : vector<1x128xf32>
    %256 = arith.addf %251, %255 : vector<1x128xf32>
    %c24 = arith.constant 24 : index
    %257 = memref.load %arg2[%c24] : memref<50xf32, #tpu.memory_space<smem>>
    %258 = vector.extract_strided_slice %0 {offsets = [4, 0], sizes = [1, 128], strides = [1, 1]} : vector<10x128xf32> to vector<1x128xf32>
    %259 = vector.broadcast %257 : f32 to vector<1x128xf32>
    %260 = arith.mulf %259, %258 : vector<1x128xf32>
    %261 = arith.addf %256, %260 : vector<1x128xf32>
    %c29 = arith.constant 29 : index
    %262 = memref.load %arg2[%c29] : memref<50xf32, #tpu.memory_space<smem>>
    %263 = vector.extract_strided_slice %0 {offsets = [5, 0], sizes = [1, 128], strides = [1, 1]} : vector<10x128xf32> to vector<1x128xf32>
    %264 = vector.broadcast %262 : f32 to vector<1x128xf32>
    %265 = arith.mulf %264, %263 : vector<1x128xf32>
    %266 = arith.addf %261, %265 : vector<1x128xf32>
    %c34 = arith.constant 34 : index
    %267 = memref.load %arg2[%c34] : memref<50xf32, #tpu.memory_space<smem>>
    %268 = vector.extract_strided_slice %0 {offsets = [6, 0], sizes = [1, 128], strides = [1, 1]} : vector<10x128xf32> to vector<1x128xf32>
    %269 = vector.broadcast %267 : f32 to vector<1x128xf32>
    %270 = arith.mulf %269, %268 : vector<1x128xf32>
    %271 = arith.addf %266, %270 : vector<1x128xf32>
    %c39 = arith.constant 39 : index
    %272 = memref.load %arg2[%c39] : memref<50xf32, #tpu.memory_space<smem>>
    %273 = vector.extract_strided_slice %0 {offsets = [7, 0], sizes = [1, 128], strides = [1, 1]} : vector<10x128xf32> to vector<1x128xf32>
    %274 = vector.broadcast %272 : f32 to vector<1x128xf32>
    %275 = arith.mulf %274, %273 : vector<1x128xf32>
    %276 = arith.addf %271, %275 : vector<1x128xf32>
    %c44 = arith.constant 44 : index
    %277 = memref.load %arg2[%c44] : memref<50xf32, #tpu.memory_space<smem>>
    %278 = vector.extract_strided_slice %0 {offsets = [8, 0], sizes = [1, 128], strides = [1, 1]} : vector<10x128xf32> to vector<1x128xf32>
    %279 = vector.broadcast %277 : f32 to vector<1x128xf32>
    %280 = arith.mulf %279, %278 : vector<1x128xf32>
    %281 = arith.addf %276, %280 : vector<1x128xf32>
    %c49 = arith.constant 49 : index
    %282 = memref.load %arg2[%c49] : memref<50xf32, #tpu.memory_space<smem>>
    %283 = vector.extract_strided_slice %0 {offsets = [9, 0], sizes = [1, 128], strides = [1, 1]} : vector<10x128xf32> to vector<1x128xf32>
    %284 = vector.broadcast %282 : f32 to vector<1x128xf32>
    %285 = arith.mulf %284, %283 : vector<1x128xf32>
    %286 = arith.addf %281, %285 : vector<1x128xf32>
    %cst_15 = arith.constant 0.000000e+00 : f32
    %287 = vector.broadcast %cst_15 : f32 to vector<1x128xf32>
    %288 = arith.maximumf %286, %287 : vector<1x128xf32>
    %c4_16 = arith.constant 4 : index
    %289 = memref.load %arg4[%c4_16] : memref<5xf32, #tpu.memory_space<smem>>
    %290 = vector.broadcast %289 : f32 to vector<1x128xf32>
    %291 = arith.mulf %290, %288 : vector<1x128xf32>
    %292 = arith.addf %234, %291 : vector<1x128xf32>
    %c0_17 = arith.constant 0 : index
    %c0_18 = arith.constant 0 : index
    %293 = vector.load %arg6[%c0_17, %c0_18] : memref<1x128xf32, #tpu.memory_space<vmem>>, vector<1x128xf32>
    tpu.vector_store %arg6[%c0_17, %c0_18], %292 {strides = array<i32>} : memref<1x128xf32, #tpu.memory_space<vmem>>, vector<1x128xf32>,
    return
  }
  func.func @transform_0(%arg0: i32) -> (i32, i32) {
    %c0_i32 = arith.constant 0 : i32
    %c0_i32_0 = arith.constant 0 : i32
    return %c0_i32, %arg0 : i32, i32
  }
  func.func @transform_1(%arg0: i32) -> i32 {
    %c0_i32 = arith.constant 0 : i32
    %c0_i32_0 = arith.constant 0 : i32
    return %c0_i32 : i32
  }
  func.func @transform_2(%arg0: i32) -> i32 {
    %c0_i32 = arith.constant 0 : i32
    %c0_i32_0 = arith.constant 0 : i32
    return %c0_i32 : i32
  }
  func.func @transform_3(%arg0: i32) -> i32 {
    %c0_i32 = arith.constant 0 : i32
    %c0_i32_0 = arith.constant 0 : i32
    return %c0_i32 : i32
  }
  func.func @transform_4(%arg0: i32) -> i32 {
    %c0_i32 = arith.constant 0 : i32
    %c0_i32_0 = arith.constant 0 : i32
    return %c0_i32 : i32
  }
  func.func @transform_5(%arg0: i32) -> (i32, i32) {
    %c0_i32 = arith.constant 0 : i32
    %c0_i32_0 = arith.constant 0 : i32
    return %c0_i32, %arg0 : i32, i32
  }
}

</mosaic_0001>

<llo_original>
// kernel: tpu_custom_call.1
$region0: #{tpu_custom_call.1}
  #allocation0 [shape = 'u32[]', space=smem, size = 0x4, offset = 0x4, fixed_abs, tag = 'smem constant byte address 0x4 - core index']
  #allocation1 [shape = 'u32[72,128]{1,0:T(1,128)}', space=vmem, size = 0x9000, scoped, tag = 'internal scratch']
  #allocation2 [shape = 'f32[1]{0:T(128)S(6)}', space=smem, size = 0x200, scoped, tag = 'scoped memory for tpu_custom_call.1']
  %s0 = inlined_call_operand.hbm [shape: f32[10,256], index: 0, kind: input, shape index: {}]
  %s1 = inlined_call_operand.vmem [shape: f32[50], index: 1, kind: input, shape index: {}]
  %s2 = inlined_call_operand.vmem [shape: f32[5], index: 2, kind: input, shape index: {}]
  %s3 = inlined_call_operand.vmem [shape: f32[5], index: 3, kind: input, shape index: {}]
  %s4 = inlined_call_operand.<no memory space> [shape: f32[1], index: 4, kind: input, shape index: {}]
  %s5 = inlined_call_operand.hbm [shape: f32[1,256], index: 5, kind: output, shape index: {}]
  %s6 = sld [smem:[#allocation0]]
  $region69: #{tpu_custom_call.1} parent=0
    _
  %s8 = ssub.s32 1, %s6
  %s9 = scalar_select 0, %s8, %s6
  %10 = sst [smem:[#allocation2]] %s4
  $region1: #{tpu_custom_call.1} parent=0
    #allocation3 [shape = 'u8[16384]{0}', space=vmem, size = 0x4000, scoped, tag = 'input window, operand 0']
    #allocation4 [shape = 's32[2]{0}', space=sflag, size = 0x8, scoped, tag = 'scoped memory for tpu_custom_call.1']
    #allocation5 [shape = 's32[2]{0}', space=sflag, size = 0x8, scoped, tag = 'scoped memory for tpu_custom_call.1']
    #allocation6 [shape = 's32[2]{0}', space=sflag, size = 0x8, scoped, tag = 'scoped memory for tpu_custom_call.1']
    #allocation7 [shape = 'u8[512]{0}', space=smem, size = 0x200, scoped, tag = 'input window, operand 1, single buffered']
    #allocation8 [shape = 'u8[512]{0}', space=smem, size = 0x200, scoped, tag = 'input window, operand 2, single buffered']
    #allocation9 [shape = 's32[1]{0}', space=sflag, size = 0x4, scoped, tag = 'scoped memory for tpu_custom_call.1']
    #allocation10 [shape = 'u8[512]{0}', space=smem, size = 0x200, scoped, tag = 'input window, operand 3, single buffered']
    #allocation11 [shape = 'u8[1024]{0}', space=vmem, size = 0x400, scoped, tag = 'output window, operand 0']
    %11 = vsyncpa [#allocation4], 0
    %s12 = scalar_lea.sflag [#allocation4], 1
    %13 = vsyncpa %s12, 0
    %14 = vsyncpa [#allocation6], 0
    %15 = vsyncpa [#allocation9], 0
    %16 = vsyncpa [#allocation5], 0
    %s17 = scalar_lea.sflag [#allocation5], 1
    %18 = vsyncpa %s17, 0
    loop: start=0, step=1, limit=4
    $region2: #{tpu_custom_call.1} parent=1 // loop_pre_header
      _
    $region3: #{tpu_custom_call.1} parent=1 // loop_header
      %s20 = sphi 0, %s24
      %p21 = scmp.ge.s32.totalorder %s20, 4
      %s30 = sphi 0, %s32
      %s33 = sphi 0, %s30
      %s34 = sphi 0, %s33
      %s50 = sphi 0, %s34
      %s54 = sphi 0, %s54
      %s56 = sphi 0, %s54
      %s57 = sphi 0, %s56
      %s71 = sphi 0, %s57
      %s75 = sphi 0, %s75
      %s77 = sphi 0, %s75
      %s78 = sphi 0, %s77
      %s92 = sphi 0, %s78
      %s96 = sphi 0, %s96
      %s98 = sphi 0, %s96
      %s99 = sphi 0, %s98
      %s113 = sphi 0, %s99
      %s117 = sphi 0, %s117
      %s119 = sphi 0, %s117
      %s120 = sphi 0, %s119
      %s134 = sphi 0, %s120
      %s140 = sphi 0, %s142
      %s143 = sphi 0, %s140
      %s144 = sphi 0, %s143
      %s160 = sphi 0, %s144
    $region4: #{tpu_custom_call.1} parent=1 // loop_header_branch
      %23 = sbr.rel (%p21) target = $region8
    $region5: #{tpu_custom_call.1} parent=1 // loop_body
      %s25 = ssub.s32 %s20, 1
      %s26 = ssub.s32 %s20, 2
      %s27 = sadd.s32 %s20, 1
      %s28 = ssub.s32 %s20, %s27
      %p29 = scmp.eq.s32.totalorder %s28, 0
      %s31 = sadd.s32 %s30, 1
      %s32 = scalar_select %p29, %s30, %s31
      %p35 = pneg %p29
      %p36 = scmp.eq.s32.totalorder %s20, 1
      %p37 = por %p35, %p36
      %p38 = scmp.ne.s32.totalorder %s30, %s33
      %p39 = scmp.eq.s32.totalorder %s20, 0
      %p40 = por %p38, %p39
      %p41 = scmp.ne.s32.totalorder %s30, %s33
      %p42 = scmp.eq.s32.totalorder %s25, 1
      %p43 = por %p41, %p42
      %p44 = scmp.ne.s32.totalorder %s33, %s34
      %p45 = scmp.eq.s32.totalorder %s25, 0
      %p46 = por %p44, %p45
      %p47 = scmp.ne.s32.totalorder %s33, %s34
      %p48 = scmp.eq.s32.totalorder %s26, 1
      %p49 = por %p47, %p48
      %p51 = scmp.ne.s32.totalorder %s34, %s50
      %p52 = scmp.eq.s32.totalorder %s26, 0
      %p53 = por %p51, %p52
      %s55 = sadd.s32 %s54, 1
      %p58 = scmp.eq.s32.totalorder %s20, 1
      %p59 = scmp.ne.s32.totalorder %s54, %s56
      %p60 = scmp.eq.s32.totalorder %s20, 0
      %p61 = por %p59, %p60
      %p62 = scmp.ne.s32.totalorder %s54, %s56
      %p63 = scmp.eq.s32.totalorder %s25, 1
      %p64 = por %p62, %p63
      %p65 = scmp.ne.s32.totalorder %s56, %s57
      %p66 = scmp.eq.s32.totalorder %s25, 0
      %p67 = por %p65, %p66
      %p68 = scmp.ne.s32.totalorder %s56, %s57
      %p69 = scmp.eq.s32.totalorder %s26, 1
      %p70 = por %p68, %p69
      %p72 = scmp.ne.s32.totalorder %s57, %s71
      %p73 = scmp.eq.s32.totalorder %s26, 0
      %p74 = por %p72, %p73
      %s76 = sadd.s32 %s75, 1
      %p79 = scmp.eq.s32.totalorder %s20, 1
      %p80 = scmp.ne.s32.totalorder %s75, %s77
      %p81 = scmp.eq.s32.totalorder %s20, 0
      %p82 = por %p80, %p81
      %p83 = scmp.ne.s32.totalorder %s75, %s77
      %p84 = scmp.eq.s32.totalorder %s25, 1
      %p85 = por %p83, %p84
      %p86 = scmp.ne.s32.totalorder %s77, %s78
      %p87 = scmp.eq.s32.totalorder %s25, 0
      %p88 = por %p86, %p87
      %p89 = scmp.ne.s32.totalorder %s77, %s78
      %p90 = scmp.eq.s32.totalorder %s26, 1
      %p91 = por %p89, %p90
      %p93 = scmp.ne.s32.totalorder %s78, %s92
      %p94 = scmp.eq.s32.totalorder %s26, 0
      %p95 = por %p93, %p94
      %s97 = sadd.s32 %s96, 1
      %p100 = scmp.eq.s32.totalorder %s20, 1
      %p101 = scmp.ne.s32.totalorder %s96, %s98
      %p102 = scmp.eq.s32.totalorder %s20, 0
      %p103 = por %p101, %p102
      %p104 = scmp.ne.s32.totalorder %s96, %s98
      %p105 = scmp.eq.s32.totalorder %s25, 1
      %p106 = por %p104, %p105
      %p107 = scmp.ne.s32.totalorder %s98, %s99
      %p108 = scmp.eq.s32.totalorder %s25, 0
      %p109 = por %p107, %p108
      %p110 = scmp.ne.s32.totalorder %s98, %s99
      %p111 = scmp.eq.s32.totalorder %s26, 1
      %p112 = por %p110, %p111
      %p114 = scmp.ne.s32.totalorder %s99, %s113
      %p115 = scmp.eq.s32.totalorder %s26, 0
      %p116 = por %p114, %p115
      %s118 = sadd.s32 %s117, 1
      %p121 = scmp.eq.s32.totalorder %s20, 1
      %p122 = scmp.ne.s32.totalorder %s117, %s119
      %p123 = scmp.eq.s32.totalorder %s20, 0
      %p124 = por %p122, %p123
      %p125 = scmp.ne.s32.totalorder %s117, %s119
      %p126 = scmp.eq.s32.totalorder %s25, 1
      %p127 = por %p125, %p126
      %p128 = scmp.ne.s32.totalorder %s119, %s120
      %p129 = scmp.eq.s32.totalorder %s25, 0
      %p130 = por %p128, %p129
      %p131 = scmp.ne.s32.totalorder %s119, %s120
      %p132 = scmp.eq.s32.totalorder %s26, 1
      %p133 = por %p131, %p132
      %p135 = scmp.ne.s32.totalorder %s120, %s134
      %p136 = scmp.eq.s32.totalorder %s26, 0
      %p137 = por %p135, %p136
      %s138 = ssub.s32 %s20, %s27
      %p139 = scmp.eq.s32.totalorder %s138, 0
      %s141 = sadd.s32 %s140, 1
      %s142 = scalar_select %p139, %s140, %s141
      %p145 = pneg %p139
      %p146 = scmp.eq.s32.totalorder %s20, 1
      %p147 = por %p145, %p146
      %p148 = scmp.ne.s32.totalorder %s140, %s143
      %p149 = scmp.eq.s32.totalorder %s20, 0
      %p150 = por %p148, %p149
      %p151 = scmp.ne.s32.totalorder %s140, %s143
      %p152 = scmp.eq.s32.totalorder %s25, 1
      %p153 = por %p151, %p152
      %p154 = scmp.ne.s32.totalorder %s143, %s144
      %p155 = scmp.eq.s32.totalorder %s25, 0
      %p156 = por %p154, %p155
      %p157 = scmp.ne.s32.totalorder %s143, %s144
      %p158 = scmp.eq.s32.totalorder %s26, 1
      %p159 = por %p157, %p158
      %p161 = scmp.ne.s32.totalorder %s144, %s160
      %p162 = scmp.eq.s32.totalorder %s26, 0
      %p163 = por %p161, %p162
      %p164 = scmp.le.s32.totalorder 1, %s20
      %p165 = scmp.lt.s32.totalorder %s20, 3
      %p166 = pnand %p164, %p165
      %p167 = pneg %p166
      // Predicated region
      $region9: #{tpu_custom_call.1} parent=5 // pred_check
        _
      $region10: #{tpu_custom_call.1} parent=5 // pred_check_branch
        %169 = sbr.rel (%p166) target = $region12
      $region11: #{tpu_custom_call.1} parent=5 // pred_region
        %s170 = ssub.s32 %s20, 1
        // Predicated region
        $region13: #{tpu_custom_call.1} parent=11 // pred_check
          %p171 = pneg %p67
        $region14: #{tpu_custom_call.1} parent=11 // pred_check_branch
          %173 = sbr.rel (%p171) target = $region16
        $region15: #{tpu_custom_call.1} parent=11 // pred_region
          %175 = vsyncadd [#allocation6], 0
          %s177 = sshll.u32 %s1, 4
          %s178 = int_to_ptr.vmem [resolvable:$true] %s177
          %180 = dma.vmem_to_smem %s178, 16, [#allocation7], [#allocation6]
        $region16: #{tpu_custom_call.1} parent=11 // pred_fallthru
          _
        // Predicated region
        $region17: #{tpu_custom_call.1} parent=11 // pred_check
          %p181 = pneg %p88
        $region18: #{tpu_custom_call.1} parent=11 // pred_check_branch
          %183 = sbr.rel (%p181) target = $region20
        $region19: #{tpu_custom_call.1} parent=11 // pred_region
          %185 = vsyncadd [#allocation9], 0
          %s187 = sshll.u32 %s2, 4
          %s188 = int_to_ptr.vmem [resolvable:$true] %s187
          %190 = dma.vmem_to_smem %s188, 16, [#allocation8], [#allocation9]
        $region20: #{tpu_custom_call.1} parent=11 // pred_fallthru
          _
        // Predicated region
        $region21: #{tpu_custom_call.1} parent=11 // pred_check
          %p191 = pneg %p109
        $region22: #{tpu_custom_call.1} parent=11 // pred_check_branch
          %193 = sbr.rel (%p191) target = $region24
        $region23: #{tpu_custom_call.1} parent=11 // pred_region
          %195 = vsyncadd [#allocation9], 0
          %s197 = sshll.u32 %s3, 4
          %s198 = int_to_ptr.vmem [resolvable:$true] %s197
          %200 = dma.vmem_to_smem %s198, 16, [#allocation10], [#allocation9]
        $region24: #{tpu_custom_call.1} parent=11 // pred_fallthru
          _
        // Predicated region
        $region25: #{tpu_custom_call.1} parent=11 // pred_check
          %p201 = pneg %p130
        $region26: #{tpu_custom_call.1} parent=11 // pred_check_branch
          %203 = sbr.rel (%p201) target = $region28
        $region27: #{tpu_custom_call.1} parent=11 // pred_region
          _
        $region28: #{tpu_custom_call.1} parent=11 // pred_fallthru
          _
      $region12: #{tpu_custom_call.1} parent=5 // pred_fallthru
        _
      %p204 = scmp.lt.s32.totalorder %s20, 2
      // Predicated region
      $region29: #{tpu_custom_call.1} parent=5 // pred_check
        %p205 = pneg %p204
      $region30: #{tpu_custom_call.1} parent=5 // pred_check_branch
        %207 = sbr.rel (%p205) target = $region32
      $region31: #{tpu_custom_call.1} parent=5 // pred_region
        // Predicated region
        $region33: #{tpu_custom_call.1} parent=31 // pred_check
          %p208 = pneg %p40
        $region34: #{tpu_custom_call.1} parent=31 // pred_check_branch
          %210 = sbr.rel (%p208) target = $region36
        $region35: #{tpu_custom_call.1} parent=31 // pred_region
          %s211 = sand.u32 %s30, 1
          %s212 = scalar_lea.sflag [#allocation4], %s211
          %s213 = sand.u32 %s30, 1
          %s214 = smul.addr %s213, 16
          %s215 = scalar_lea.vmem [#allocation3], %s214
          %217 = vsyncadd %s212, 0
          %s218 = smul.addr %s20, 8
          %s219 = scalar_lea.hbm %s0, %s218
          %s220 = sshll.u32 %s219, 4
          %s221 = int_to_ptr.hbm [resolvable:$true] %s220
          %s222 = sshll.u32 %s215, 4
          %s223 = int_to_ptr.vmem [resolvable:$true] %s222
          %228 = dma.hbm_to_vmem [thread:$0]  %s221, 256, %s223, %s212, 256, 128, 8
        $region36: #{tpu_custom_call.1} parent=31 // pred_fallthru
          _
      $region32: #{tpu_custom_call.1} parent=5 // pred_fallthru
        _
      %p229 = scmp.le.s32.totalorder 1, %s20
      %p230 = scmp.lt.s32.totalorder %s20, 3
      %p231 = pnand %p229, %p230
      %p232 = pneg %p231
      // Predicated region
      $region37: #{tpu_custom_call.1} parent=5 // pred_check
        _
      $region38: #{tpu_custom_call.1} parent=5 // pred_check_branch
        %234 = sbr.rel (%p231) target = $region40
      $region39: #{tpu_custom_call.1} parent=5 // pred_region
        %s235 = ssub.s32 %s20, 1
        %s236 = sand.u32 %s33, 1
        %s237 = scalar_lea.sflag [#allocation4], %s236
        %s238 = sand.u32 %s33, 1
        %s239 = smul.addr %s238, 16
        %s240 = scalar_lea.vmem [#allocation3], %s239
        // Predicated region
        $region41: #{tpu_custom_call.1} parent=39 // pred_check
          %p241 = pneg %p46
        $region42: #{tpu_custom_call.1} parent=39 // pred_check_branch
          %243 = sbr.rel (%p241) target = $region44
        $region43: #{tpu_custom_call.1} parent=39 // pred_region
          %245 = dma.done %s237, 256
        $region44: #{tpu_custom_call.1} parent=39 // pred_fallthru
          _
        // Predicated region
        $region45: #{tpu_custom_call.1} parent=39 // pred_check
          %p246 = pneg %p67
        $region46: #{tpu_custom_call.1} parent=39 // pred_check_branch
          %248 = sbr.rel (%p246) target = $region48
        $region47: #{tpu_custom_call.1} parent=39 // pred_region
          %250 = dma.done [#allocation6], 16
        $region48: #{tpu_custom_call.1} parent=39 // pred_fallthru
          _
        // Predicated region
        $region49: #{tpu_custom_call.1} parent=39 // pred_check
          %p251 = pneg %p88
        $region50: #{tpu_custom_call.1} parent=39 // pred_check_branch
          %253 = sbr.rel (%p251) target = $region52
        $region51: #{tpu_custom_call.1} parent=39 // pred_region
          %255 = dma.done [#allocation9], 16
        $region52: #{tpu_custom_call.1} parent=39 // pred_fallthru
          _
        // Predicated region
        $region53: #{tpu_custom_call.1} parent=39 // pred_check
          %p256 = pneg %p109
        $region54: #{tpu_custom_call.1} parent=39 // pred_check_branch
          %258 = sbr.rel (%p256) target = $region56
        $region55: #{tpu_custom_call.1} parent=39 // pred_region
          %260 = dma.done [#allocation9], 16
        $region56: #{tpu_custom_call.1} parent=39 // pred_fallthru
          _
        %261 = sfence
        %s262 = sand.u32 %s33, 1
        %s263 = scalar_lea.sflag [#allocation4], %s262
        %s264 = sand.u32 %s33, 1
        %s265 = smul.addr %s264, 16
        %s266 = scalar_lea.vmem [#allocation3], %s265
        %p267 = pneg %p46
        %p268 = pneg %p43
        %p269 = pneg %p67
        %p270 = pneg %p64
        %p271 = pneg %p88
        %p272 = pneg %p85
        %p273 = pneg %p109
        %p274 = pneg %p106
        %p275 = pneg %p130
        %p276 = pneg %p127
        %p277 = pneg %p156
        %p278 = pneg %p153
        %s279 = sand.u32 %s143, 1
        %s280 = scalar_lea.sflag [#allocation5], %s279
        %s281 = sand.u32 %s143, 1
        %s282 = scalar_lea.vmem [#allocation11], %s281
        %v283 = vld [vmem:[%s240] sm:$0xff]
        %v284 = vld [vmem:[%s240 + $0x8] sm:$0x3]
        %s285 = sld [smem:[#allocation2]]
        %v286 = vstv %s285
        %s287 = sld [smem:[#allocation8]]
        %v288 = vstv %s287
        %s289 = sld [smem:[#allocation7]]
        %v290 = vstv %s289
        %v291 = vmul.f32 %v290, %v283
        %v292 = vadd.f32 %v288, %v291
        %s293 = sld [smem:[#allocation7 + $0x5]]
        %v294 = vstv %s293
        %v295 = vmul.f32 %v294, %v283
        %v297 = vrot.slane %v295, 1
        %v299 = vadd.f32 %v292, %v297
        %s300 = sld [smem:[#allocation7 + $0xa]]
        %v301 = vstv %s300
        %v302 = vmul.f32 %v301, %v283
        %v304 = vrot.slane %v302, 2
        %v306 = vadd.f32 %v299, %v304
        %s307 = sld [smem:[#allocation7 + $0xf]]
        %v308 = vstv %s307
        %v309 = vmul.f32 %v308, %v283
        %v311 = vrot.slane %v309, 3
        %v313 = vadd.f32 %v306, %v311
        %s314 = sld [smem:[#allocation7 + $0x14]]
        %v315 = vstv %s314
        %v316 = vmul.f32 %v315, %v283
        %v318 = vrot.slane %v316, 4
        %v320 = vadd.f32 %v313, %v318
        %s321 = sld [smem:[#allocation7 + $0x19]]
        %v322 = vstv %s321
        %v323 = vmul.f32 %v322, %v283
        %v325 = vrot.slane %v323, 5
        %v327 = vadd.f32 %v320, %v325
        %s328 = sld [smem:[#allocation7 + $0x1e]]
        %v329 = vstv %s328
        %v330 = vmul.f32 %v329, %v283
        %v332 = vrot.slane %v330, 6
        %v334 = vadd.f32 %v327, %v332
        %s335 = sld [smem:[#allocation7 + $0x23]]
        %v336 = vstv %s335
        %v337 = vmul.f32 %v336, %v283
        %v339 = vrot.slane %v337, 7
        %v341 = vadd.f32 %v334, %v339
        %s342 = sld [smem:[#allocation7 + $0x28]]
        %v343 = vstv %s342
        %v344 = vmul.f32 %v343, %v284
        %v345 = vadd.f32 %v341, %v344
        %s346 = sld [smem:[#allocation7 + $0x2d]]
        %v347 = vstv %s346
        %v348 = vmul.f32 %v347, %v284
        %v350 = vrot.slane %v348, 1
        %v352 = vadd.f32 %v345, %v350
        %v353 = vmax.f32 %v352, 0.0
        %s354 = sld [smem:[#allocation10]]
        %v355 = vstv %s354
        %v356 = vmul.f32 %v355, %v353
        %v357 = vadd.f32 %v286, %v356
        %s358 = sld [smem:[#allocation8 + $0x1]]
        %v359 = vstv %s358
        %s360 = sld [smem:[#allocation7 + $0x1]]
        %v361 = vstv %s360
        %v362 = vmul.f32 %v361, %v283
        %v363 = vadd.f32 %v359, %v362
        %s364 = sld [smem:[#allocation7 + $0x6]]
        %v365 = vstv %s364
        %v366 = vmul.f32 %v365, %v283
        %v368 = vrot.slane %v366, 1
        %v370 = vadd.f32 %v363, %v368
        %s371 = sld [smem:[#allocation7 + $0xb]]
        %v372 = vstv %s371
        %v373 = vmul.f32 %v372, %v283
        %v375 = vrot.slane %v373, 2
        %v377 = vadd.f32 %v370, %v375
        %s378 = sld [smem:[#allocation7 + $0x10]]
        %v379 = vstv %s378
        %v380 = vmul.f32 %v379, %v283
        %v382 = vrot.slane %v380, 3
        %v384 = vadd.f32 %v377, %v382
        %s385 = sld [smem:[#allocation7 + $0x15]]
        %v386 = vstv %s385
        %v387 = vmul.f32 %v386, %v283
        %v389 = vrot.slane %v387, 4
        %v391 = vadd.f32 %v384, %v389
        %s392 = sld [smem:[#allocation7 + $0x1a]]
        %v393 = vstv %s392
        %v394 = vmul.f32 %v393, %v283
        %v396 = vrot.slane %v394, 5
        %v398 = vadd.f32 %v391, %v396
        %s399 = sld [smem:[#allocation7 + $0x1f]]
        %v400 = vstv %s399
        %v401 = vmul.f32 %v400, %v283
        %v403 = vrot.slane %v401, 6
        %v405 = vadd.f32 %v398, %v403
        %s406 = sld [smem:[#allocation7 + $0x24]]
        %v407 = vstv %s406
        %v408 = vmul.f32 %v407, %v283
        %v410 = vrot.slane %v408, 7
        %v412 = vadd.f32 %v405, %v410
        %s413 = sld [smem:[#allocation7 + $0x29]]
        %v414 = vstv %s413
        %v415 = vmul.f32 %v414, %v284
        %v416 = vadd.f32 %v412, %v415
        %s417 = sld [smem:[#allocation7 + $0x2e]]
        %v418 = vstv %s417
        %v419 = vmul.f32 %v418, %v284
        %v421 = vrot.slane %v419, 1
        %v423 = vadd.f32 %v416, %v421
        %v424 = vmax.f32 %v423, 0.0
        %s425 = sld [smem:[#allocation10 + $0x1]]
        %v426 = vstv %s425
        %v427 = vmul.f32 %v426, %v424
        %v428 = vadd.f32 %v357, %v427
        %s429 = sld [smem:[#allocation8 + $0x2]]
        %v430 = vstv %s429
        %s431 = sld [smem:[#allocation7 + $0x2]]
        %v432 = vstv %s431
        %v433 = vmul.f32 %v432, %v283
        %v434 = vadd.f32 %v430, %v433
        %s435 = sld [smem:[#allocation7 + $0x7]]
        %v436 = vstv %s435
        %v437 = vmul.f32 %v436, %v283
        %v439 = vrot.slane %v437, 1
        %v441 = vadd.f32 %v434, %v439
        %s442 = sld [smem:[#allocation7 + $0xc]]
        %v443 = vstv %s442
        %v444 = vmul.f32 %v443, %v283
        %v446 = vrot.slane %v444, 2
        %v448 = vadd.f32 %v441, %v446
        %s449 = sld [smem:[#allocation7 + $0x11]]
        %v450 = vstv %s449
        %v451 = vmul.f32 %v450, %v283
        %v453 = vrot.slane %v451, 3
        %v455 = vadd.f32 %v448, %v453
        %s456 = sld [smem:[#allocation7 + $0x16]]
        %v457 = vstv %s456
        %v458 = vmul.f32 %v457, %v283
        %v460 = vrot.slane %v458, 4
        %v462 = vadd.f32 %v455, %v460
        %s463 = sld [smem:[#allocation7 + $0x1b]]
        %v464 = vstv %s463
        %v465 = vmul.f32 %v464, %v283
        %v467 = vrot.slane %v465, 5
        %v469 = vadd.f32 %v462, %v467
        %s470 = sld [smem:[#allocation7 + $0x20]]
        %v471 = vstv %s470
        %v472 = vmul.f32 %v471, %v283
        %v474 = vrot.slane %v472, 6
        %v476 = vadd.f32 %v469, %v474
        %s477 = sld [smem:[#allocation7 + $0x25]]
        %v478 = vstv %s477
        %v479 = vmul.f32 %v478, %v283
        %v481 = vrot.slane %v479, 7
        %v483 = vadd.f32 %v476, %v481
        %s484 = sld [smem:[#allocation7 + $0x2a]]
        %v485 = vstv %s484
        %v486 = vmul.f32 %v485, %v284
        %v487 = vadd.f32 %v483, %v486
        %s488 = sld [smem:[#allocation7 + $0x2f]]
        %v489 = vstv %s488
        %v490 = vmul.f32 %v489, %v284
        %v492 = vrot.slane %v490, 1
        %v494 = vadd.f32 %v487, %v492
        %v495 = vmax.f32 %v494, 0.0
        %s496 = sld [smem:[#allocation10 + $0x2]]
        %v497 = vstv %s496
        %v498 = vmul.f32 %v497, %v495
        %v499 = vadd.f32 %v428, %v498
        %s500 = sld [smem:[#allocation8 + $0x3]]
        %v501 = vstv %s500
        %s502 = sld [smem:[#allocation7 + $0x3]]
        %v503 = vstv %s502
        %v504 = vmul.f32 %v503, %v283
        %v505 = vadd.f32 %v501, %v504
        %s506 = sld [smem:[#allocation7 + $0x8]]
        %v507 = vstv %s506
        %v508 = vmul.f32 %v507, %v283
        %v510 = vrot.slane %v508, 1
        %v512 = vadd.f32 %v505, %v510
        %s513 = sld [smem:[#allocation7 + $0xd]]
        %v514 = vstv %s513
        %v515 = vmul.f32 %v514, %v283
        %v517 = vrot.slane %v515, 2
        %v519 = vadd.f32 %v512, %v517
        %s520 = sld [smem:[#allocation7 + $0x12]]
        %v521 = vstv %s520
        %v522 = vmul.f32 %v521, %v283
        %v524 = vrot.slane %v522, 3
        %v526 = vadd.f32 %v519, %v524
        %s527 = sld [smem:[#allocation7 + $0x17]]
        %v528 = vstv %s527
        %v529 = vmul.f32 %v528, %v283
        %v531 = vrot.slane %v529, 4
        %v533 = vadd.f32 %v526, %v531
        %s534 = sld [smem:[#allocation7 + $0x1c]]
        %v535 = vstv %s534
        %v536 = vmul.f32 %v535, %v283
        %v538 = vrot.slane %v536, 5
        %v540 = vadd.f32 %v533, %v538
        %s541 = sld [smem:[#allocation7 + $0x21]]
        %v542 = vstv %s541
        %v543 = vmul.f32 %v542, %v283
        %v545 = vrot.slane %v543, 6
        %v547 = vadd.f32 %v540, %v545
        %s548 = sld [smem:[#allocation7 + $0x26]]
        %v549 = vstv %s548
        %v550 = vmul.f32 %v549, %v283
        %v552 = vrot.slane %v550, 7
        %v554 = vadd.f32 %v547, %v552
        %s555 = sld [smem:[#allocation7 + $0x2b]]
        %v556 = vstv %s555
        %v557 = vmul.f32 %v556, %v284
        %v558 = vadd.f32 %v554, %v557
        %s559 = sld [smem:[#allocation7 + $0x30]]
        %v560 = vstv %s559
        %v561 = vmul.f32 %v560, %v284
        %v563 = vrot.slane %v561, 1
        %v565 = vadd.f32 %v558, %v563
        %v566 = vmax.f32 %v565, 0.0
        %s567 = sld [smem:[#allocation10 + $0x3]]
        %v568 = vstv %s567
        %v569 = vmul.f32 %v568, %v566
        %v570 = vadd.f32 %v499, %v569
        %s571 = sld [smem:[#allocation8 + $0x4]]
        %v572 = vstv %s571
        %s573 = sld [smem:[#allocation7 + $0x4]]
        %v574 = vstv %s573
        %v575 = vmul.f32 %v574, %v283
        %v576 = vadd.f32 %v572, %v575
        %s577 = sld [smem:[#allocation7 + $0x9]]
        %v578 = vstv %s577
        %v579 = vmul.f32 %v578, %v283
        %v581 = vrot.slane %v579, 1
        %v583 = vadd.f32 %v576, %v581
        %s584 = sld [smem:[#allocation7 + $0xe]]
        %v585 = vstv %s584
        %v586 = vmul.f32 %v585, %v283
        %v588 = vrot.slane %v586, 2
        %v590 = vadd.f32 %v583, %v588
        %s591 = sld [smem:[#allocation7 + $0x13]]
        %v592 = vstv %s591
        %v593 = vmul.f32 %v592, %v283
        %v595 = vrot.slane %v593, 3
        %v597 = vadd.f32 %v590, %v595
        %s598 = sld [smem:[#allocation7 + $0x18]]
        %v599 = vstv %s598
        %v600 = vmul.f32 %v599, %v283
        %v602 = vrot.slane %v600, 4
        %v604 = vadd.f32 %v597, %v602
        %s605 = sld [smem:[#allocation7 + $0x1d]]
        %v606 = vstv %s605
        %v607 = vmul.f32 %v606, %v283
        %v609 = vrot.slane %v607, 5
        %v611 = vadd.f32 %v604, %v609
        %s612 = sld [smem:[#allocation7 + $0x22]]
        %v613 = vstv %s612
        %v614 = vmul.f32 %v613, %v283
        %v616 = vrot.slane %v614, 6
        %v618 = vadd.f32 %v611, %v616
        %s619 = sld [smem:[#allocation7 + $0x27]]
        %v620 = vstv %s619
        %v621 = vmul.f32 %v620, %v283
        %v623 = vrot.slane %v621, 7
        %v625 = vadd.f32 %v618, %v623
        %s626 = sld [smem:[#allocation7 + $0x2c]]
        %v627 = vstv %s626
        %v628 = vmul.f32 %v627, %v284
        %v629 = vadd.f32 %v625, %v628
        %s630 = sld [smem:[#allocation7 + $0x31]]
        %v631 = vstv %s630
        %v632 = vmul.f32 %v631, %v284
        %v634 = vrot.slane %v632, 1
        %v636 = vadd.f32 %v629, %v634
        %v637 = vmax.f32 %v636, 0.0
        %s638 = sld [smem:[#allocation10 + $0x4]]
        %v639 = vstv %s638
        %v640 = vmul.f32 %v639, %v637
        %v641 = vadd.f32 %v570, %v640
        %642 = vst [vmem:[%s282] sm:$0x1] %v641
        %s643 = sand.u32 %s143, 1
        %s644 = scalar_lea.sflag [#allocation5], %s643
        %s645 = sand.u32 %s143, 1
        %s646 = scalar_lea.vmem [#allocation11], %s645
        // Predicated region
        $region57: #{tpu_custom_call.1} parent=39 // pred_check
          %p647 = pneg %p153
        $region58: #{tpu_custom_call.1} parent=39 // pred_check_branch
          %649 = sbr.rel (%p647) target = $region60
        $region59: #{tpu_custom_call.1} parent=39 // pred_region
          %651 = vsyncadd %s644, 0
          %s652 = scalar_lea.hbm %s5, %s25
          %s654 = sshll.u32 %s646, 4
          %s655 = int_to_ptr.vmem [resolvable:$true] %s654
          %s656 = sshll.u32 %s652, 4
          %s657 = int_to_ptr.hbm [resolvable:$true] %s656
          %659 = dma.vmem_to_hbm [thread:$0]  %s655, 16, %s657, %s644
        $region60: #{tpu_custom_call.1} parent=39 // pred_fallthru
          _
      $region40: #{tpu_custom_call.1} parent=5 // pred_fallthru
        _
      %p660 = scmp.le.s32.totalorder 2, %s20
      // Predicated region
      $region61: #{tpu_custom_call.1} parent=5 // pred_check
        %p661 = pneg %p660
      $region62: #{tpu_custom_call.1} parent=5 // pred_check_branch
        %663 = sbr.rel (%p661) target = $region64
      $region63: #{tpu_custom_call.1} parent=5 // pred_region
        %s664 = ssub.s32 %s20, 2
        // Predicated region
        $region65: #{tpu_custom_call.1} parent=63 // pred_check
          %p665 = pneg %p159
        $region66: #{tpu_custom_call.1} parent=63 // pred_check_branch
          %667 = sbr.rel (%p665) target = $region68
        $region67: #{tpu_custom_call.1} parent=63 // pred_region
          %s668 = sand.u32 %s144, 1
          %s669 = scalar_lea.sflag [#allocation5], %s668
          %s670 = sand.u32 %s144, 1
          %s671 = scalar_lea.vmem [#allocation11], %s670
          %673 = dma.done %s669, 16
        $region68: #{tpu_custom_call.1} parent=63 // pred_fallthru
          _
      $region64: #{tpu_custom_call.1} parent=5 // pred_fallthru
        _
    $region6: #{tpu_custom_call.1} parent=1 // loop_footer
      %s24 = sadd.s32 1, %s20
    $region7: #{tpu_custom_call.1} parent=1 // loop_footer_branch
      %19 = sbr.rel target = $region3
    $region8: #{tpu_custom_call.1} parent=1 // loop_exit
      _
    %674 = vsyncpa [#allocation4], 1
    %s675 = scalar_lea.sflag [#allocation4], 1
    %676 = vsyncpa %s675, 1
    %677 = vsyncpa [#allocation5], 1
    %s678 = scalar_lea.sflag [#allocation5], 1
    %679 = vsyncpa %s678, 1
    %680 = vsyncpa [#allocation6], 1
    %s681 = scalar_lea.sflag [#allocation6], 1
    %682 = vsyncpa %s681, 1
    %683 = vsyncpa [#allocation9], 1

</llo_original>
